<compile_context>
chip_gen: v7x
topology: tpu7x:2x2x1
jax: 0.10.0
libtpu: 0.0.40
codegen_flags: <defaults>
</compile_context>

<pallas_src>
import jax
import jax.numpy as jnp
from jax.experimental import pallas as pl
from jax.experimental.pallas import tpu as pltpu

INPUT_DIM = 192
HIDDEN_DIM = 32
OUTPUT_DIM = 5


def _round_up(n: int, m: int) -> int:
    return ((n + m - 1) // m) * m


def mlp_kernel(x_ref, w1_ref, w2_ref, o_ref):
    # fc1: (TB, in) @ (in, hidden) -> (TB, hidden), f32 accumulation on the MXU.
    h = jnp.dot(x_ref[...], w1_ref[...], preferred_element_type=jnp.float32)
    # ReLU on the VPU, done on the f32 accumulator.
    h = jnp.maximum(h, 0.0)
    # fc2: (TB, hidden) @ (hidden, out) -> (TB, out).  In bf16 streaming mode
    # the activation is rounded back to bf16 (K=32, negligible); f32 otherwise.
    out = jnp.dot(h.astype(w2_ref.dtype), w2_ref[...],
                  preferred_element_type=jnp.float32)
    # TODO(synk): OUTPUT_DIM=5 -> masked vst.msk partial stores; output bytes
    # are ~2.6% of input bytes so the lane-dense (transposed) output trick is
    # intentionally skipped (apply only if a trace shows the writeback exposed).
    o_ref[...] = out.astype(o_ref.dtype)


def simple_nn_forward(x, w1_t, w2_t, *, block_b: int = 8192):
    """Forward pass of SimpleNN.

    x:    (B, INPUT_DIM)            -- streamed from HBM in its own dtype
                                       (store x as bf16 upstream for the
                                       half-bandwidth path; do NOT cast here).
    w1_t: (INPUT_DIM, HIDDEN_DIM)   -- fc1 weight, pre-transposed.
    w2_t: (HIDDEN_DIM, OUTPUT_DIM)  -- fc2 weight, pre-transposed.
    block_b: batch-tile rows per grid step (tunable per generation; 8192 f32
             fits every generation's scoped/physical VMEM with double-buffering).
    Returns (B, OUTPUT_DIM) float32 (accumulation is always f32).
    """
    B, in_dim = x.shape
    assert in_dim == INPUT_DIM
    assert w1_t.shape == (INPUT_DIM, HIDDEN_DIM)
    assert w2_t.shape == (HIDDEN_DIM, OUTPUT_DIM)

    # Compute/streaming dtype follows x; weights are tiny (~25 KiB) so casting
    # them in the wrapper is free.
    compute_dtype = x.dtype
    w1_t = w1_t.astype(compute_dtype)
    w2_t = w2_t.astype(compute_dtype)

    # Sublane granularity: 8 rows for 32-bit, 16 for bf16 (packed sublanes).
    row_mult = 16 if compute_dtype == jnp.bfloat16 else 8
    tb = min(block_b, _round_up(B, row_mult))
    tb = max(row_mult, _round_up(tb, row_mult))

    # No whole-array padding: Pallas handles the partial trailing tile.  Safe
    # here because there is no reduction over the batch axis inside the kernel
    # and only in-bounds output rows are materialized.
    grid = (pl.cdiv(B, tb),)

    itemsize = jnp.dtype(compute_dtype).itemsize

    # Size the scoped-VMEM limit to the chosen tile (x is double-buffered by
    # the pipeline), floor 32 MiB, cap 56 MiB (< v7x 64 MiB physical).
    vmem_needed = (2 * tb * INPUT_DIM * itemsize          # x double buffer
                   + 2 * tb * OUTPUT_DIM * 4              # out double buffer
                   + (INPUT_DIM * HIDDEN_DIM
                      + HIDDEN_DIM * OUTPUT_DIM) * itemsize  # resident weights
                   + tb * HIDDEN_DIM * 4                  # f32 hidden activation
                   + tb * OUTPUT_DIM * 4)                 # f32 fc2 accumulator
    vmem_limit = min(max(int(vmem_needed * 3 // 2), 32 << 20), 56 << 20)

    cost = pl.CostEstimate(
        flops=2 * B * (INPUT_DIM * HIDDEN_DIM + HIDDEN_DIM * OUTPUT_DIM),
        transcendentals=0,
        bytes_accessed=(B * INPUT_DIM * itemsize
                        + INPUT_DIM * HIDDEN_DIM * itemsize
                        + HIDDEN_DIM * OUTPUT_DIM * itemsize
                        + B * OUTPUT_DIM * 4),
    )

    out = pl.pallas_call(
        mlp_kernel,
        out_shape=jax.ShapeDtypeStruct((B, OUTPUT_DIM), jnp.float32),
        grid_spec=pltpu.PrefetchScalarGridSpec(
            num_scalar_prefetch=0,
            grid=grid,
            in_specs=[
                # x streamed tile-by-tile (double-buffered by the pipeline).
                pl.BlockSpec((tb, INPUT_DIM), lambda i: (i, 0)),
                # Weights: constant block index -> fetched once, VMEM-resident.
                pl.BlockSpec((INPUT_DIM, HIDDEN_DIM), lambda i: (0, 0)),
                pl.BlockSpec((HIDDEN_DIM, OUTPUT_DIM), lambda i: (0, 0)),
            ],
            out_specs=pl.BlockSpec((tb, OUTPUT_DIM), lambda i: (i, 0)),
        ),
        compiler_params=pltpu.CompilerParams(
            # Batch tiles are independent.
            # TODO(synk): on v7x, verify in an xprof trace that both
            # TensorCores run grid steps; force pltpu.CORE_PARALLEL if not.
            dimension_semantics=("parallel",),
            vmem_limit_bytes=vmem_limit,
        ),
        cost_estimate=cost,
    )(x, w1_t, w2_t)

    return out


def reference_forward(x, w1_t, w2_t):
    h = jnp.maximum(x.astype(jnp.float32) @ w1_t.astype(jnp.float32), 0.0)
    return h @ w2_t.astype(jnp.float32)


if __name__ == "__main__":
    key = jax.random.PRNGKey(0)
    k_x, k_w1, k_w2, k_x2 = jax.random.split(key, 4)

    # Deterministic init mimicking nn.Linear (Kaiming-uniform-ish bounds);
    # PyTorch stores (out, in) -> pre-transpose to (in, out) for the kernel.
    bound1 = 1.0 / jnp.sqrt(jnp.float32(INPUT_DIM))
    bound2 = 1.0 / jnp.sqrt(jnp.float32(HIDDEN_DIM))
    w1 = jax.random.uniform(k_w1, (HIDDEN_DIM, INPUT_DIM),
                            minval=-bound1, maxval=bound1, dtype=jnp.float32)
    w2 = jax.random.uniform(k_w2, (OUTPUT_DIM, HIDDEN_DIM),
                            minval=-bound2, maxval=bound2, dtype=jnp.float32)
    w1_t = w1.T  # (INPUT_DIM, HIDDEN_DIM)
    w2_t = w2.T  # (HIDDEN_DIM, OUTPUT_DIM)

    # 1) Small, non-multiple-of-8 batch: exercises the partial-tile path.
    batch = 10
    x = jax.random.normal(k_x, (batch, INPUT_DIM), dtype=jnp.float32)
    ref = reference_forward(x, w1_t, w2_t)
    out = jax.block_until_ready(simple_nn_forward(x, w1_t, w2_t))
    assert out.shape == (batch, OUTPUT_DIM)
    assert jnp.allclose(out, ref, atol=1e-5, rtol=1e-5)

    # 2) Multi-tile batch with a ragged trailing tile and small block_b to
    #    exercise the pipelined grid (no wrapper-side padding of x).
    batch2 = 1000
    x2 = jax.random.normal(k_x2, (batch2, INPUT_DIM), dtype=jnp.float32)
    ref2 = reference_forward(x2, w1_t, w2_t)
    out2 = jax.block_until_ready(simple_nn_forward(x2, w1_t, w2_t, block_b=256))
    assert out2.shape == (batch2, OUTPUT_DIM)
    assert jnp.allclose(out2, ref2, atol=1e-4, rtol=1e-4)

    # 3) bf16 streaming path: x already lives in HBM as bf16 (cast happens
    #    upstream, not in the wrapper); f32 accumulation inside the kernel.
    x_bf16 = x.astype(jnp.bfloat16)
    out_bf16 = jax.block_until_ready(simple_nn_forward(x_bf16, w1_t, w2_t))
    assert out_bf16.shape == (batch, OUTPUT_DIM)
    assert jnp.allclose(out_bf16, ref, atol=5e-2, rtol=5e-2)

    print("KERNEL_OK")
</pallas_src>

<mosaic_0001>
module attributes {stable_mosaic.version = 11 : i64} {
  func.func @mlp_kernel(%arg0: i32, %arg1: memref<16x192xf32, #tpu.memory_space<vmem>>, %arg2: memref<192x32xf32, #tpu.memory_space<vmem>>, %arg3: memref<32x5xf32, #tpu.memory_space<vmem>>, %arg4: memref<16x5xf32, #tpu.memory_space<vmem>>) attributes {dimension_semantics = [#tpu.dimension_semantics<parallel>], iteration_bounds = array<i64: 1>, scalar_prefetch = 0 : i64, scratch_operands = 0 : i64, tpu.core_type = #tpu.core_type<tc>, window_params = [{transform_indices = @transform_0, window_bounds = array<i64: 16, 192>}, {pipeline_mode = #tpu.pipeline_mode<synchronous>, transform_indices = @transform_1, window_bounds = array<i64: 192, 32>}, {pipeline_mode = #tpu.pipeline_mode<synchronous>, transform_indices = @transform_2, window_bounds = array<i64: 32, 5>}, {transform_indices = @transform_3, window_bounds = array<i64: 16, 5>}]} {
    %c0 = arith.constant 0 : index
    %c0_0 = arith.constant 0 : index
    %0 = vector.load %arg1[%c0, %c0_0] : memref<16x192xf32, #tpu.memory_space<vmem>>, vector<16x192xf32>
    %c0_1 = arith.constant 0 : index
    %c0_2 = arith.constant 0 : index
    %1 = vector.load %arg2[%c0_1, %c0_2] : memref<192x32xf32, #tpu.memory_space<vmem>>, vector<192x32xf32>
    %cst = arith.constant dense<0.000000e+00> : vector<16x32xf32>
    %2 = tpu.matmul %0, %1, %cst {dimension_numbers = #tpu.dot_dimension_numbers<[1], [0], [0], [1], [0, 0, 1, 1], [], []>} : vector<16x192xf32>, vector<192x32xf32>, vector<16x32xf32> -> vector<16x32xf32>
    %cst_3 = arith.constant 0.000000e+00 : f32
    %3 = vector.broadcast %cst_3 : f32 to vector<16x32xf32>
    %4 = arith.maximumf %2, %3 : vector<16x32xf32>
    %c0_4 = arith.constant 0 : index
    %c0_5 = arith.constant 0 : index
    %5 = vector.load %arg3[%c0_4, %c0_5] : memref<32x5xf32, #tpu.memory_space<vmem>>, vector<32x5xf32>
    %cst_6 = arith.constant dense<0.000000e+00> : vector<16x5xf32>
    %6 = tpu.matmul %4, %5, %cst_6 {dimension_numbers = #tpu.dot_dimension_numbers<[1], [0], [0], [1], [0, 0, 1, 1], [], []>} : vector<16x32xf32>, vector<32x5xf32>, vector<16x5xf32> -> vector<16x5xf32>
    %c0_7 = arith.constant 0 : index
    %c0_8 = arith.constant 0 : index
    %7 = vector.load %arg4[%c0_7, %c0_8] : memref<16x5xf32, #tpu.memory_space<vmem>>, vector<16x5xf32>
    tpu.vector_store %arg4[%c0_7, %c0_8], %6 {strides = array<i32>} : memref<16x5xf32, #tpu.memory_space<vmem>>, vector<16x5xf32>,
    return
  }
  func.func @transform_0(%arg0: i32) -> (i32, i32) {
    %c0_i32 = arith.constant 0 : i32
    %c0_i32_0 = arith.constant 0 : i32
    return %arg0, %c0_i32 : i32, i32
  }
  func.func @transform_1(%arg0: i32) -> (i32, i32) {
    %c0_i32 = arith.constant 0 : i32
    %c0_i32_0 = arith.constant 0 : i32
    %c0_i32_1 = arith.constant 0 : i32
    return %c0_i32, %c0_i32_0 : i32, i32
  }
  func.func @transform_2(%arg0: i32) -> (i32, i32) {
    %c0_i32 = arith.constant 0 : i32
    %c0_i32_0 = arith.constant 0 : i32
    %c0_i32_1 = arith.constant 0 : i32
    return %c0_i32, %c0_i32_0 : i32, i32
  }
  func.func @transform_3(%arg0: i32) -> (i32, i32) {
    %c0_i32 = arith.constant 0 : i32
    %c0_i32_0 = arith.constant 0 : i32
    return %arg0, %c0_i32 : i32, i32
  }
}

</mosaic_0001>

<llo_original>
// kernel: tpu_custom_call.1
$region0: #{tpu_custom_call.1}
  #allocation0 [shape = 'u32[]', space=smem, size = 0x4, offset = 0x4, fixed_abs, tag = 'smem constant byte address 0x4 - core index']
  #allocation1 [shape = 'u32[144,128]{1,0:T(1,128)}', space=vmem, size = 0x12000, scoped, tag = 'internal scratch']
  %s0 = inlined_call_operand.vmem [shape: f32[10,192], index: 0, kind: input, shape index: {}]
  %s1 = inlined_call_operand.vmem [shape: f32[192,32], index: 1, kind: input, shape index: {}]
  %s2 = inlined_call_operand.vmem [shape: f32[32,5], index: 2, kind: input, shape index: {}]
  %s3 = inlined_call_operand.vmem [shape: f32[10,5], index: 3, kind: output, shape index: {}]
  %s4 = sld [smem:[#allocation0]]
  $region22: #{tpu_custom_call.1} parent=0
    _
  %s6 = ssub.s32 1, %s4
  %s7 = scalar_select 0, %s6, %s4
  // Predicated region
  $region2: #{tpu_custom_call.1} parent=0 // pred_check
    _
  $region3: #{tpu_custom_call.1} parent=0 // pred_check_branch
    %9 = sbr.rel (0) target = $region5
  $region4: #{tpu_custom_call.1} parent=0 // pred_region
    _
  $region5: #{tpu_custom_call.1} parent=0 // pred_fallthru
    _
  // Predicated region
  $region6: #{tpu_custom_call.1} parent=0 // pred_check
    _
  $region7: #{tpu_custom_call.1} parent=0 // pred_check_branch
    %11 = sbr.rel (0) target = $region9
  $region8: #{tpu_custom_call.1} parent=0 // pred_region
    _
  $region9: #{tpu_custom_call.1} parent=0 // pred_fallthru
    _
  // Predicated region
  $region10: #{tpu_custom_call.1} parent=0 // pred_check
    _
  $region11: #{tpu_custom_call.1} parent=0 // pred_check_branch
    %13 = sbr.rel (0) target = $region13
  $region12: #{tpu_custom_call.1} parent=0 // pred_region
    _
  $region13: #{tpu_custom_call.1} parent=0 // pred_fallthru
    _
  %v14 = vld [vmem:[%s0] sm:$0xff]
  %v15 = vld [vmem:[%s0 + $0x8] sm:$0xff]
  %v16 = vld [vmem:[%s0 + $0x10] sm:$0xff]
  %v17 = vld [vmem:[%s0 + $0x18] sm:$0xff]
  %v18 = vld [vmem:[%s1] sm:$0xff]
  %v19 = vld [vmem:[%s1 + $0x8] sm:$0xff]
  %v20 = vld [vmem:[%s1 + $0x10] sm:$0xff]
  %v21 = vld [vmem:[%s1 + $0x18] sm:$0xff]
  %v22 = vld [vmem:[%s1 + $0x20] sm:$0xff]
  %v23 = vld [vmem:[%s1 + $0x28] sm:$0xff]
  %v24 = vld [vmem:[%s1 + $0x30] sm:$0xff]
  %v25 = vld [vmem:[%s1 + $0x38] sm:$0xff]
  %v26 = vld [vmem:[%s1 + $0x40] sm:$0xff]
  %v27 = vld [vmem:[%s1 + $0x48] sm:$0xff]
  %v28 = vld [vmem:[%s1 + $0x50] sm:$0xff]
  %v29 = vld [vmem:[%s1 + $0x58] sm:$0xff]
  %v30 = vld [vmem:[%s1 + $0x60] sm:$0xff]
  %v31 = vld [vmem:[%s1 + $0x68] sm:$0xff]
  %v32 = vld [vmem:[%s1 + $0x70] sm:$0xff]
  %v33 = vld [vmem:[%s1 + $0x78] sm:$0xff]
  %v34 = vld [vmem:[%s1 + $0x80] sm:$0xff]
  %v35 = vld [vmem:[%s1 + $0x88] sm:$0xff]
  %v36 = vld [vmem:[%s1 + $0x90] sm:$0xff]
  %v37 = vld [vmem:[%s1 + $0x98] sm:$0xff]
  %v38 = vld [vmem:[%s1 + $0xa0] sm:$0xff]
  %v39 = vld [vmem:[%s1 + $0xa8] sm:$0xff]
  %v40 = vld [vmem:[%s1 + $0xb0] sm:$0xff]
  %v41 = vld [vmem:[%s1 + $0xb8] sm:$0xff]
  %vm42 = vcmask 523264
  %v44 = vsel %vm42, %v15, 0
  %v47 = vsel %vm42, %v17, 0
  %49 = vmatprep.subr.mxu0 0.0
  %50 = vmatpush1.msra.mxu0 %v18
  %51 = vmatprep.subr.mxu0 0.0
  %52 = vmatpush1.msra.mxu0 %v19
  %53 = vmatprep.subr.mxu0 0.0
  %54 = vmatpush1.msra.mxu0 %v20
  %55 = vmatprep.subr.mxu0 0.0
  %56 = vmatpush1.msra.mxu0 %v21
  %57 = vmatprep.subr.mxu0 0.0
  %58 = vmatpush1.msra.mxu0 %v22
  %59 = vmatprep.subr.mxu0 0.0
  %60 = vmatpush1.msra.mxu0 %v23
  %61 = vmatprep.subr.mxu0 0.0
  %62 = vmatpush1.msra.mxu0 %v24
  %63 = vmatprep.subr.mxu0 0.0
  %64 = vmatpush1.msra.mxu0 %v25
  %65 = vmatprep.subr.mxu0 0.0
  %66 = vmatpush1.msra.mxu0 %v26
  %67 = vmatprep.subr.mxu0 0.0
  %68 = vmatpush1.msra.mxu0 %v27
  %69 = vmatprep.subr.mxu0 0.0
  %70 = vmatpush1.msra.mxu0 %v28
  %71 = vmatprep.subr.mxu0 0.0
  %72 = vmatpush1.msra.mxu0 %v29
  %73 = vmatprep.subr.mxu0 0.0
  %74 = vmatpush1.msra.mxu0 %v30
  %75 = vmatprep.subr.mxu0 0.0
  %76 = vmatpush1.msra.mxu0 %v31
  %77 = vmatprep.subr.mxu0 0.0
  %78 = vmatpush1.msra.mxu0 %v32
  %79 = vmatprep.subr.mxu0 0.0
  %80 = vmatpush1.msra.mxu0 %v33
  %81 = vmatprep.subr.mxu0 0.0
  %82 = vmatpush1.msra.mxu0 %v34
  %83 = vmatprep.subr.mxu0 0.0
  %84 = vmatpush1.msra.mxu0 %v35
  %85 = vmatprep.subr.mxu0 0.0
  %86 = vmatpush1.msra.mxu0 %v36
  %87 = vmatprep.subr.mxu0 0.0
  %88 = vmatpush1.msra.mxu0 %v37
  %89 = vmatprep.subr.mxu0 0.0
  %90 = vmatpush1.msra.mxu0 %v38
  %91 = vmatprep.subr.mxu0 0.0
  %92 = vmatpush1.msra.mxu0 %v39
  %93 = vmatprep.subr.mxu0 0.0
  %94 = vmatpush1.msra.mxu0 %v40
  %95 = vmatprep.subr.mxu0 0.0
  %96 = vmatpush1.msra.mxu0 %v41
  %97 = vmatprep.subr.mxu0 0.0
  %98 = vmatpush1.msra.mxu0 0.0
  %99 = vmatprep.subr.mxu0 0.0
  %100 = vmatpush1.msra.mxu0 0.0
  %101 = vmatprep.subr.mxu0 0.0
  %102 = vmatpush1.msra.mxu0 0.0
  %103 = vmatprep.subr.mxu0 0.0
  %104 = vmatpush1.msra.mxu0 0.0
  %105 = vmatprep.subr.mxu0 0.0
  %106 = vmatpush1.msra.mxu0 0.0
  %107 = vmatprep.subr.mxu0 0.0
  %108 = vmatpush1.msra.mxu0 0.0
  %109 = vmatprep.subr.mxu0 0.0
  %110 = vmatpush1.msra.mxu0 0.0
  %111 = vmatprep.subr.mxu0 0.0
  %112 = vmatpush1.msra.mxu0 0.0
  %113 = vmatprep.mubr.f32.mxu0 %v44
  %114 = vmatmul.mubr.f32.gmra.mrb[0].mxu0 %v14
  %v115 = vpop.f32.mrb[0].mxu0
  %v116 = vadd.f32 0.0, %v115
  %v117 = vpop.f32.mrb[0].mxu0
  %118 = vmatprep.mubr.f32.mxu0 %v47
  %119 = vmatmul.mubr.f32.gmra.mrb[0].mxu0 %v16
  %v120 = vpop.f32.mrb[0].mxu0
  %v121 = vadd.f32 0.0, %v120
  %v122 = vpop.f32.mrb[0].mxu0
  %123 = vdwg.mxu0
  %v124 = vmax.f32 %v116, 0.0
  %v125 = vmax.f32 %v121, 0.0
  %v126 = vld [vmem:[%s2] sm:$0xff]
  %v127 = vld [vmem:[%s2 + $0x8] sm:$0xff]
  %v128 = vld [vmem:[%s2 + $0x10] sm:$0xff]
  %v129 = vld [vmem:[%s2 + $0x18] sm:$0xff]
  %vm130 = vcmask 261120
  %v132 = vsel %vm130, %v124, 0
  %v135 = vsel %vm130, %v125, 0
  %137 = vmatprep.subr.mxu0 0.0
  %138 = vmatpush1.msra.mxu0 %v126
  %139 = vmatprep.subr.mxu0 0.0
  %140 = vmatpush1.msra.mxu0 %v127
  %141 = vmatprep.subr.mxu0 0.0
  %142 = vmatpush1.msra.mxu0 %v128
  %143 = vmatprep.subr.mxu0 0.0
  %144 = vmatpush1.msra.mxu0 %v129
  %145 = vmatprep.subr.mxu0 0.0
  %146 = vmatpush1.msra.mxu0 0.0
  %147 = vmatprep.subr.mxu0 0.0
  %148 = vmatpush1.msra.mxu0 0.0
  %149 = vmatprep.subr.mxu0 0.0
  %150 = vmatpush1.msra.mxu0 0.0
  %151 = vmatprep.subr.mxu0 0.0
  %152 = vmatpush1.msra.mxu0 0.0
  %153 = vmatprep.subr.mxu0 0.0
  %154 = vmatpush1.msra.mxu0 0.0
  %155 = vmatprep.subr.mxu0 0.0
  %156 = vmatpush1.msra.mxu0 0.0
  %157 = vmatprep.subr.mxu0 0.0
  %158 = vmatpush1.msra.mxu0 0.0
  %159 = vmatprep.subr.mxu0 0.0
  %160 = vmatpush1.msra.mxu0 0.0
  %161 = vmatprep.subr.mxu0 0.0
  %162 = vmatpush1.msra.mxu0 0.0
  %163 = vmatprep.subr.mxu0 0.0
  %164 = vmatpush1.msra.mxu0 0.0
  %165 = vmatprep.subr.mxu0 0.0
  %166 = vmatpush1.msra.mxu0 0.0
  %167 = vmatprep.subr.mxu0 0.0
  %168 = vmatpush1.msra.mxu0 0.0
  %169 = vmatprep.subr.mxu0 0.0
  %170 = vmatpush1.msra.mxu0 0.0
  %171 = vmatprep.subr.mxu0 0.0
  %172 = vmatpush1.msra.mxu0 0.0
  %173 = vmatprep.subr.mxu0 0.0
  %174 = vmatpush1.msra.mxu0 0.0
  %175 = vmatprep.subr.mxu0 0.0
  %176 = vmatpush1.msra.mxu0 0.0
  %177 = vmatprep.subr.mxu0 0.0
  %178 = vmatpush1.msra.mxu0 0.0
  %179 = vmatprep.subr.mxu0 0.0
  %180 = vmatpush1.msra.mxu0 0.0
  %181 = vmatprep.subr.mxu0 0.0
  %182 = vmatpush1.msra.mxu0 0.0
  %183 = vmatprep.subr.mxu0 0.0
  %184 = vmatpush1.msra.mxu0 0.0
  %185 = vmatprep.subr.mxu0 0.0
  %186 = vmatpush1.msra.mxu0 0.0
  %187 = vmatprep.subr.mxu0 0.0
  %188 = vmatpush1.msra.mxu0 0.0
  %189 = vmatprep.subr.mxu0 0.0
  %190 = vmatpush1.msra.mxu0 0.0
  %191 = vmatprep.subr.mxu0 0.0
  %192 = vmatpush1.msra.mxu0 0.0
  %193 = vmatprep.subr.mxu0 0.0
  %194 = vmatpush1.msra.mxu0 0.0
  %195 = vmatprep.subr.mxu0 0.0
  %196 = vmatpush1.msra.mxu0 0.0
  %197 = vmatprep.subr.mxu0 0.0
  %198 = vmatpush1.msra.mxu0 0.0
  %199 = vmatprep.subr.mxu0 0.0
  %200 = vmatpush1.msra.mxu0 0.0
  %201 = vmatprep.mubr.f32.mxu0 0.0
  %202 = vmatmul.mubr.f32.gmra.mrb[0].mxu0 %v132
  %v203 = vpop.f32.mrb[0].mxu0
  %v204 = vadd.f32 0.0, %v203
  %v205 = vpop.f32.mrb[0].mxu0
  %206 = vmatprep.mubr.f32.mxu0 0.0
  %207 = vmatmul.mubr.f32.gmra.mrb[0].mxu0 %v135
  %v208 = vpop.f32.mrb[0].mxu0
  %v209 = vadd.f32 0.0, %v208
  %v210 = vpop.f32.mrb[0].mxu0
  %211 = vdwg.mxu0
  %vm212 = vcmask 39936
  %213 = vst.msk [vmem:[%s3] sm:$0xff] %vm212, %v204
  %214 = vst.msk [vmem:[%s3 + $0x8] sm:$0xff] %vm212, %v209
  // Predicated region
  $region14: #{tpu_custom_call.1} parent=0 // pred_check
    _
  $region15: #{tpu_custom_call.1} parent=0 // pred_check_branch
    %216 = sbr.rel (0) target = $region17
  $region16: #{tpu_custom_call.1} parent=0 // pred_region
    _
  $region17: #{tpu_custom_call.1} parent=0 // pred_fallthru
    _
  // Predicated region
  $region18: #{tpu_custom_call.1} parent=0 // pred_check
    _
  $region19: #{tpu_custom_call.1} parent=0 // pred_check_branch
    %218 = sbr.rel (0) target = $region21
  $region20: #{tpu_custom_call.1} parent=0 // pred_region
    _
  $region21: #{tpu_custom_call.1} parent=0 // pred_fallthru
    _

</llo_original>
